<compile_context>
chip_gen: v7x
topology: tpu7x:2x2x1
jax: 0.10.0
libtpu: 0.0.40
codegen_flags: <defaults>
</compile_context>

<pallas_src>
import functools

import jax
import jax.numpy as jnp
from jax.experimental import pallas as pl
from jax.experimental.pallas import tpu as pltpu


def _round_up(a, b):
    return (a + b - 1) // b * b


def _interaction_agg_kernel(x_ref, y_ref, wblk_ref, wy_ref, o_ref):
    # x feeds only the MXU: keep it in its native (DMA) dtype.
    x = x_ref[...]                                                    # [tm, Dx]

    # One MXU push against the augmented block-diagonal weight:
    #   z[:, :Dy] = x @ W_blk      (per-head bilinear, all heads at once)
    #   z[:,  Dy] = x . w_x        (fused linear term)
    z = jnp.dot(x, wblk_ref[...], preferred_element_type=jnp.float32)  # [tm, Dy+1]

    Dy = y_ref.shape[-1]
    y = y_ref[...].astype(jnp.float32)                                 # [tm, Dy]

    # wy_ref = [w_y | bx+by]: folds the w_y linear term into the elementwise
    # product and the shared bias into the fused w_x column.
    t = z + wy_ref[...]                                                # [tm, Dy+1]
    res = jnp.sum(y * t[:, :Dy], axis=-1) + t[:, Dy]                   # [tm]

    # Lane-dense store: one row of tm lanes per grid step.
    o_ref[...] = res.reshape(1, -1).astype(o_ref.dtype)


@functools.partial(jax.jit, static_argnames=("num_heads", "tm"))
def interaction_aggregation(x, y, wx, bx, wy, by, w_xy, *, num_heads, tm=4096):
    """x: [B, I, Dx], y: [B, I, Dy].  Returns [B, I] (output_dim == 1)."""
    B, I, Dx = x.shape
    Dy = y.shape[-1]
    N = B * I
    hx = Dx // num_heads
    hy = Dy // num_heads

    # TODO(synk): only the output_dim == 1 case (module default) is implemented.
    # TODO(synk): the block-diagonal trick is only MXU-efficient while Dx, Dy
    # fit one MXU tile; for wider features switch to a per-head contraction.
    assert Dx <= 256 and Dy <= 256, "use per-head contraction for wide features"
    assert tm % 128 == 0, "tm must be a multiple of 128"

    # ----- glue: augmented block-diagonal bilinear weight [Dx, Dy+1] -------
    w_heads = w_xy.astype(jnp.float32).reshape(num_heads, hx, hy)
    w_blk = jax.scipy.linalg.block_diag(*[w_heads[h] for h in range(num_heads)])
    w_blk_aug = jnp.concatenate(
        [w_blk, wx.astype(jnp.float32).reshape(Dx, 1)], axis=1)        # [Dx, Dy+1]
    w_blk_aug = w_blk_aug.astype(x.dtype)   # native MXU path (bf16 stays bf16)
    wy_aug = jnp.concatenate(
        [wy.astype(jnp.float32).reshape(1, Dy),
         jnp.asarray(bx + by, jnp.float32).reshape(1, 1)], axis=1)     # [1, Dy+1]

    # ----- tile-size selection (no wrapper-side padding of x/y) ------------
    if N < 256:
        # Tiny inputs are per-step-overhead bound anyway: one tile.
        tm_eff = _round_up(max(N, 1), 8)
        num_tiles = 1
    else:
        # >= 2 grid steps so the "parallel" axis shards across v7x's two TCs;
        # otherwise use the largest tile (<= tm) to amortize step overhead.
        tm_eff = min(tm, _round_up(pl.cdiv(N, 2), 128))
        num_tiles = pl.cdiv(N, tm_eff)
    Np = num_tiles * tm_eff   # only the (tiny) output is over-allocated

    # Native dtype straight through the DMA; casts happen in-kernel.
    x2 = x.reshape(N, Dx)
    y2 = y.reshape(N, Dy)

    # Explicit VMEM budget: double-buffered x/y tiles + resident weights + out.
    in_bytes = 2 * tm_eff * (Dx * x.dtype.itemsize + Dy * y.dtype.itemsize)
    w_bytes = Dx * (Dy + 1) * w_blk_aug.dtype.itemsize + (Dy + 1) * 4
    out_bytes = 2 * tm_eff * 4
    vmem_limit = int(min(max(4 * (in_bytes + w_bytes + out_bytes), 32 << 20),
                         64 << 20))

    out = pl.pallas_call(
        _interaction_agg_kernel,
        out_shape=jax.ShapeDtypeStruct((1, Np), jnp.float32),
        grid_spec=pltpu.PrefetchScalarGridSpec(
            num_scalar_prefetch=0,
            grid=(num_tiles,),
            in_specs=[
                # Last block may extend past N: tail rows are unspecified but
                # every row is independent and tail outputs are sliced off.
                pl.BlockSpec((tm_eff, Dx), lambda i: (i, 0)),
                pl.BlockSpec((tm_eff, Dy), lambda i: (i, 0)),
                pl.BlockSpec((Dx, Dy + 1), lambda i: (0, 0)),
                pl.BlockSpec((1, Dy + 1), lambda i: (0, 0)),
            ],
            out_specs=pl.BlockSpec((1, tm_eff), lambda i: (0, i)),
        ),
        compiler_params=pltpu.CompilerParams(
            dimension_semantics=("parallel",),
            vmem_limit_bytes=vmem_limit),
    )(x2, y2, w_blk_aug, wy_aug)

    return out[0, :N].reshape(B, I)


def _reference(x, y, wx, bx, wy, by, w_xy, num_heads):
    """Pure-JAX replica of the PyTorch forward (output_dim = 1)."""
    B, I, Dx = x.shape
    Dy = y.shape[-1]
    N = B * I
    hx = Dx // num_heads
    hy = Dy // num_heads
    out = x @ wx.T + bx + y @ wy.T + by                       # [B, I, 1]
    head_x = x.reshape(N, num_heads, hx)
    head_y = y.reshape(N, num_heads, hy)
    wv = w_xy.reshape(num_heads, hx, hy)                      # output_dim == 1
    t = jnp.einsum("nhi,hij->nhj", head_x, wv)                # [N, H, hy]
    xy = jnp.einsum("nhj,nhj->nh", t, head_y)                 # [N, H]
    xy_sum = xy.sum(axis=1).reshape(B, I, 1)
    return (out + xy_sum).squeeze(-1)                         # [B, I]


def _make_params(key, x_dim, y_dim, num_heads, output_dim=1):
    k_wx, k_bx, k_wy, k_by, k_wxy = jax.random.split(key, 5)
    wx = jax.random.normal(k_wx, (output_dim, x_dim), jnp.float32) * 0.1
    bx = jax.random.normal(k_bx, (output_dim,), jnp.float32)[0] * 0.1
    wy = jax.random.normal(k_wy, (output_dim, y_dim), jnp.float32) * 0.1
    by = jax.random.normal(k_by, (output_dim,), jnp.float32)[0] * 0.1
    hx, hy = x_dim // num_heads, y_dim // num_heads
    std = (2.0 / (num_heads * hx * hy + output_dim)) ** 0.5   # xavier_normal_
    w_xy = jax.random.normal(k_wxy, (num_heads * hx * hy, output_dim),
                             jnp.float32) * std
    return wx, bx, wy, by, w_xy


if __name__ == "__main__":
    key = jax.random.PRNGKey(0)
    k_small, k_big, k_p1, k_p2 = jax.random.split(key, 4)

    # ---- small-shape check (module-consistent: [batch, item_num, dim]) ----
    B, I = 2, 8
    x_dim, y_dim, num_heads = 32, 32, 2
    kx, ky = jax.random.split(k_small)
    x = jax.random.normal(kx, (B, I, x_dim), jnp.float32)
    y = jax.random.normal(ky, (B, I, y_dim), jnp.float32)
    wx, bx, wy, by, w_xy = _make_params(k_p1, x_dim, y_dim, num_heads)

    out = interaction_aggregation(x, y, wx, bx, wy, by, w_xy,
                                  num_heads=num_heads)
    out = jax.block_until_ready(out)
    ref = _reference(x, y, wx, bx, wy, by, w_xy, num_heads)
    assert out.shape == (B, I)
    assert jnp.allclose(out, ref, atol=1e-4, rtol=1e-4)

    # ---- multi-tile check (>=2 parallel grid steps + ragged tail block) ---
    B2, I2 = 8, 400                        # N = 3200 -> tm_eff=1664, grid=2
    kx2, ky2 = jax.random.split(k_big)
    x2 = jax.random.normal(kx2, (B2, I2, x_dim), jnp.float32)
    y2 = jax.random.normal(ky2, (B2, I2, y_dim), jnp.float32)
    wx2, bx2, wy2, by2, w_xy2 = _make_params(k_p2, x_dim, y_dim, num_heads)

    out2 = interaction_aggregation(x2, y2, wx2, bx2, wy2, by2, w_xy2,
                                   num_heads=num_heads)
    out2 = jax.block_until_ready(out2)
    ref2 = _reference(x2, y2, wx2, bx2, wy2, by2, w_xy2, num_heads)
    assert out2.shape == (B2, I2)
    assert jnp.allclose(out2, ref2, atol=1e-3, rtol=1e-3)

    print("KERNEL_OK")
</pallas_src>

<mosaic_0001>
module attributes {stable_mosaic.version = 11 : i64} {
  func.func @_interaction_agg_kernel(%arg0: i32, %arg1: memref<16x32xf32, #tpu.memory_space<vmem>>, %arg2: memref<16x32xf32, #tpu.memory_space<vmem>>, %arg3: memref<32x33xf32, #tpu.memory_space<vmem>>, %arg4: memref<1x33xf32, #tpu.memory_space<vmem>>, %arg5: memref<1x16xf32, #tpu.memory_space<vmem>>) attributes {dimension_semantics = [#tpu.dimension_semantics<parallel>], iteration_bounds = array<i64: 1>, scalar_prefetch = 0 : i64, scratch_operands = 0 : i64, tpu.core_type = #tpu.core_type<tc>, window_params = [{transform_indices = @transform_0, window_bounds = array<i64: 16, 32>}, {transform_indices = @transform_1, window_bounds = array<i64: 16, 32>}, {pipeline_mode = #tpu.pipeline_mode<synchronous>, transform_indices = @transform_2, window_bounds = array<i64: 32, 33>}, {pipeline_mode = #tpu.pipeline_mode<synchronous>, transform_indices = @transform_3, window_bounds = array<i64: 1, 33>}, {transform_indices = @transform_4, window_bounds = array<i64: 1, 16>}]} {
    %c0 = arith.constant 0 : index
    %c0_0 = arith.constant 0 : index
    %0 = vector.load %arg1[%c0, %c0_0] : memref<16x32xf32, #tpu.memory_space<vmem>>, vector<16x32xf32>
    %c0_1 = arith.constant 0 : index
    %c0_2 = arith.constant 0 : index
    %1 = vector.load %arg3[%c0_1, %c0_2] : memref<32x33xf32, #tpu.memory_space<vmem>>, vector<32x33xf32>
    %cst = arith.constant dense<0.000000e+00> : vector<16x33xf32>
    %2 = tpu.matmul %0, %1, %cst {dimension_numbers = #tpu.dot_dimension_numbers<[1], [0], [0], [1], [0, 0, 1, 1], [], []>} : vector<16x32xf32>, vector<32x33xf32>, vector<16x33xf32> -> vector<16x33xf32>
    %c0_3 = arith.constant 0 : index
    %c0_4 = arith.constant 0 : index
    %3 = vector.load %arg2[%c0_3, %c0_4] : memref<16x32xf32, #tpu.memory_space<vmem>>, vector<16x32xf32>
    %c0_5 = arith.constant 0 : index
    %c0_6 = arith.constant 0 : index
    %4 = vector.load %arg4[%c0_5, %c0_6] : memref<1x33xf32, #tpu.memory_space<vmem>>, vector<1x33xf32>
    %5 = vector.broadcast %4 : vector<1x33xf32> to vector<16x33xf32>
    %6 = arith.addf %2, %5 : vector<16x33xf32>
    %7 = vector.extract_strided_slice %6 {offsets = [0, 0], sizes = [16, 32], strides = [1, 1]} : vector<16x33xf32> to vector<16x32xf32>
    %8 = arith.mulf %3, %7 : vector<16x32xf32>
    %cst_7 = arith.constant dense<0.000000e+00> : vector<16xf32>
    %9 = vector.multi_reduction <add>, %8, %cst_7 [1] : vector<16x32xf32> to vector<16xf32>
    %10 = vector.extract_strided_slice %6 {offsets = [0, 32], sizes = [16, 1], strides = [1, 1]} : vector<16x33xf32> to vector<16x1xf32>
    %11 = vector.shape_cast %10 : vector<16x1xf32> to vector<16xf32>
    %12 = arith.addf %9, %11 : vector<16xf32>
    %13 = vector.shape_cast %12 : vector<16xf32> to vector<1x16xf32>
    %c0_8 = arith.constant 0 : index
    %c0_9 = arith.constant 0 : index
    %14 = vector.load %arg5[%c0_8, %c0_9] : memref<1x16xf32, #tpu.memory_space<vmem>>, vector<1x16xf32>
    tpu.vector_store %arg5[%c0_8, %c0_9], %13 {strides = array<i32>} : memref<1x16xf32, #tpu.memory_space<vmem>>, vector<1x16xf32>,
    return
  }
  func.func @transform_0(%arg0: i32) -> (i32, i32) {
    %c0_i32 = arith.constant 0 : i32
    %c0_i32_0 = arith.constant 0 : i32
    return %arg0, %c0_i32 : i32, i32
  }
  func.func @transform_1(%arg0: i32) -> (i32, i32) {
    %c0_i32 = arith.constant 0 : i32
    %c0_i32_0 = arith.constant 0 : i32
    return %arg0, %c0_i32 : i32, i32
  }
  func.func @transform_2(%arg0: i32) -> (i32, i32) {
    %c0_i32 = arith.constant 0 : i32
    %c0_i32_0 = arith.constant 0 : i32
    %c0_i32_1 = arith.constant 0 : i32
    return %c0_i32, %c0_i32_0 : i32, i32
  }
  func.func @transform_3(%arg0: i32) -> (i32, i32) {
    %c0_i32 = arith.constant 0 : i32
    %c0_i32_0 = arith.constant 0 : i32
    %c0_i32_1 = arith.constant 0 : i32
    return %c0_i32, %c0_i32_0 : i32, i32
  }
  func.func @transform_4(%arg0: i32) -> (i32, i32) {
    %c0_i32 = arith.constant 0 : i32
    %c0_i32_0 = arith.constant 0 : i32
    return %c0_i32, %arg0 : i32, i32
  }
}

</mosaic_0001>

<llo_original>
// kernel: squeeze.3
$region0: #{squeeze.3}
  %s0 = inlined_call_operand.vmem [shape: f32[256], index: 0, kind: input, shape index: {}]
  %s1 = inlined_call_operand.vmem [shape: f32[16,16], index: 1, kind: output, shape index: {}]
  $region1: #{squeeze.3} parent=0
    #allocation0 [shape = 'u8[4096]{0}', space=vmem, size = 0x1000, scoped, tag = 'scoped mem for input reshape']
    %s3 = sshllo.u32 0, 2
    %v4 = vld [vmem:[%s0] sm:%s3]
    %5 = vst [vmem:[#allocation0] sm:%s3] %v4
    %v6 = vld [vmem:[#allocation0] sm:$0x3]
    %vm7 = vcmask 130048
    %8 = vst.msk [vmem:[%s1] ss:$8 sm:$0x3] %vm7, %v6
    %v9 = vld [vmem:[#allocation0] sm:$0x3]
    %10 = vrot.lane.b32.xlu0 %v9, 112
    %v11 = vpop.permute.xlu0 %10
    %vm12 = vcmask 130048
    %s13 = scalar_lea.vmem %s1, 1
    %14 = vst.msk [vmem:[%s13] ss:$8 sm:$0x3] %vm12, %v11
    %v15 = vld [vmem:[#allocation0] sm:$0x3]
    %16 = vrot.lane.b32.xlu0 %v15, 96
    %v17 = vpop.permute.xlu0 %16
    %vm18 = vcmask 130048
    %s19 = scalar_lea.vmem %s1, 2
    %20 = vst.msk [vmem:[%s19] ss:$8 sm:$0x3] %vm18, %v17
    %v21 = vld [vmem:[#allocation0] sm:$0x3]
    %22 = vrot.lane.b32.xlu0 %v21, 80
    %v23 = vpop.permute.xlu0 %22
    %vm24 = vcmask 130048
    %s25 = scalar_lea.vmem %s1, 3
    %26 = vst.msk [vmem:[%s25] ss:$8 sm:$0x3] %vm24, %v23
    %v27 = vld [vmem:[#allocation0] sm:$0x3]
    %28 = vrot.lane.b32.xlu0 %v27, 64
    %v29 = vpop.permute.xlu0 %28
    %vm30 = vcmask 130048
    %s31 = scalar_lea.vmem %s1, 4
    %32 = vst.msk [vmem:[%s31] ss:$8 sm:$0x3] %vm30, %v29
    %v33 = vld [vmem:[#allocation0] sm:$0x3]
    %34 = vrot.lane.b32.xlu0 %v33, 48
    %v35 = vpop.permute.xlu0 %34
    %vm36 = vcmask 130048
    %s37 = scalar_lea.vmem %s1, 5
    %38 = vst.msk [vmem:[%s37] ss:$8 sm:$0x3] %vm36, %v35
    %v39 = vld [vmem:[#allocation0] sm:$0x3]
    %40 = vrot.lane.b32.xlu0 %v39, 32
    %v41 = vpop.permute.xlu0 %40
    %vm42 = vcmask 130048
    %s43 = scalar_lea.vmem %s1, 6
    %44 = vst.msk [vmem:[%s43] ss:$8 sm:$0x3] %vm42, %v41
    %v45 = vld [vmem:[#allocation0] sm:$0x3]
    %46 = vrot.lane.b32.xlu0 %v45, 16
    %v47 = vpop.permute.xlu0 %46
    %vm48 = vcmask 130048
    %s49 = scalar_lea.vmem %s1, 7
    %50 = vst.msk [vmem:[%s49] ss:$8 sm:$0x3] %vm48, %v47

// kernel: squeeze.5
$region0: #{squeeze.5}
  %s0 = inlined_call_operand.vmem [shape: f32[16], index: 0, kind: input, shape index: {}]
  %s1 = inlined_call_operand.hbm [shape: f32[2,8], index: 1, kind: output, shape index: {}]
  $region1: #{squeeze.5} parent=0
    #allocation0 [shape = 'u8[1024]{0}', space=vmem, size = 0x400, scoped, tag = 'operand span for operand 1']
    #allocation1 [shape = 's32[1]{0}', space=sflag, size = 0x4, scoped, tag = 'scoped memory for squeeze.5']
    #allocation2 [shape = 'u8[4096]{0}', space=vmem, size = 0x1000, scoped, tag = 'scoped mem for output reshape']
    #allocation3 [shape = 'u8[4096]{0}', space=vmem, size = 0x1000, scoped, tag = 'scoped mem for input reshape']
    %2 = vsyncpa [#allocation1], 0
    %s4 = sshllo.u32 0, 1
    %v5 = vld [vmem:[%s0] sm:%s4]
    %6 = vst [vmem:[#allocation3] sm:%s4] %v5
    %v7 = vld [vmem:[#allocation3] sm:$0x1]
    %vm8 = vcmask 64512
    %9 = vst.msk [vmem:[#allocation2] sm:$0x1] %vm8, %v7
    %v10 = vld [vmem:[#allocation3] sm:$0x1]
    %11 = vrot.lane.b32.xlu0 %v10, 120
    %v12 = vpop.permute.xlu0 %11
    %vm13 = vcmask 64512
    %s14 = scalar_lea.vmem [#allocation2], 1
    %15 = vst.msk [vmem:[%s14] sm:$0x1] %vm13, %v12
    %s17 = sshllo.u32 0, 2
    %v19 = vld [vmem:[#allocation2] sm:%s17]
    %s20 = sshllo.u32 0, 2
    %21 = vst [vmem:[#allocation0] sm:%s20] %v19
    %s23 = ssub.s32 32, 32
    %24 = vsyncadd [#allocation1], %s23
    %s26 = sshll.u32 [#allocation0], 4
    %s27 = int_to_ptr.vmem [resolvable:$true] %s26
    %29 = dma.vmem_to_hbm [thread:$0]  %s27, 32, %s1, [#allocation1]
    %30 = dma.done [#allocation1], 32
    %31 = vsyncpa [#allocation1], 1

// kernel: interaction_aggregation.1
$region0: #{interaction_aggregation.1}
  #allocation0 [shape = 'u32[]', space=smem, size = 0x4, offset = 0x4, fixed_abs, tag = 'smem constant byte address 0x4 - core index']
  #allocation1 [shape = 'u32[144,128]{1,0:T(1,128)}', space=vmem, size = 0x12000, scoped, tag = 'internal scratch']
  %s0 = inlined_call_operand.vmem [shape: f32[16,32], index: 0, kind: input, shape index: {}]
  %s1 = inlined_call_operand.vmem [shape: f32[16,32], index: 1, kind: input, shape index: {}]
  %s2 = inlined_call_operand.vmem [shape: f32[32,33], index: 2, kind: input, shape index: {}]
  %s3 = inlined_call_operand.vmem [shape: f32[1,33], index: 3, kind: input, shape index: {}]
  %s4 = inlined_call_operand.vmem [shape: f32[1,16], index: 4, kind: output, shape index: {}]
  %s5 = sld [smem:[#allocation0]]
  $region26: #{interaction_aggregation.1} parent=0
    _
  %s7 = ssub.s32 1, %s5
  %s8 = scalar_select 0, %s7, %s5
  // Predicated region
  $region2: #{interaction_aggregation.1} parent=0 // pred_check
    _
  $region3: #{interaction_aggregation.1} parent=0 // pred_check_branch
    %10 = sbr.rel (0) target = $region5
  $region4: #{interaction_aggregation.1} parent=0 // pred_region
    _
  $region5: #{interaction_aggregation.1} parent=0 // pred_fallthru
    _
  // Predicated region
  $region6: #{interaction_aggregation.1} parent=0 // pred_check
    _
  $region7: #{interaction_aggregation.1} parent=0 // pred_check_branch
    %12 = sbr.rel (0) target = $region9
  $region8: #{interaction_aggregation.1} parent=0 // pred_region
    _
  $region9: #{interaction_aggregation.1} parent=0 // pred_fallthru
    _
  // Predicated region
  $region10: #{interaction_aggregation.1} parent=0 // pred_check
    _
  $region11: #{interaction_aggregation.1} parent=0 // pred_check_branch
    %14 = sbr.rel (0) target = $region13
  $region12: #{interaction_aggregation.1} parent=0 // pred_region
    _
  $region13: #{interaction_aggregation.1} parent=0 // pred_fallthru
    _
  // Predicated region
  $region14: #{interaction_aggregation.1} parent=0 // pred_check
    _
  $region15: #{interaction_aggregation.1} parent=0 // pred_check_branch
    %16 = sbr.rel (0) target = $region17
  $region16: #{interaction_aggregation.1} parent=0 // pred_region
    _
  $region17: #{interaction_aggregation.1} parent=0 // pred_fallthru
    _
  %v17 = vld [vmem:[%s0] sm:$0xff]
  %v18 = vld [vmem:[%s0 + $0x8] sm:$0xff]
  %v19 = vld [vmem:[%s2] sm:$0xff]
  %v20 = vld [vmem:[%s2 + $0x8] sm:$0xff]
  %v21 = vld [vmem:[%s2 + $0x10] sm:$0xff]
  %v22 = vld [vmem:[%s2 + $0x18] sm:$0xff]
  %v23 = vld [vmem:[%s1] sm:$0xff]
  %v24 = vld [vmem:[%s1 + $0x8] sm:$0xff]
  %v25 = vld [vmem:[%s3] sm:$0x1]
  %v27 = vlaneseq
  %v28 = vshrl.u32 %v27, 7
  %v29 = vsub.s32 0, %v28
  %v30 = vrot.slane %v25, %v29
  %vm32 = vcmask 261120
  %v34 = vsel %vm32, %v17, 0
  %v37 = vsel %vm32, %v18, 0
  %39 = vmatprep.subr.mxu0 0.0
  %40 = vmatpush1.msra.mxu0 %v19
  %41 = vmatprep.subr.mxu0 0.0
  %42 = vmatpush1.msra.mxu0 %v20
  %43 = vmatprep.subr.mxu0 0.0
  %44 = vmatpush1.msra.mxu0 %v21
  %45 = vmatprep.subr.mxu0 0.0
  %46 = vmatpush1.msra.mxu0 %v22
  %47 = vmatprep.subr.mxu0 0.0
  %48 = vmatpush1.msra.mxu0 0.0
  %49 = vmatprep.subr.mxu0 0.0
  %50 = vmatpush1.msra.mxu0 0.0
  %51 = vmatprep.subr.mxu0 0.0
  %52 = vmatpush1.msra.mxu0 0.0
  %53 = vmatprep.subr.mxu0 0.0
  %54 = vmatpush1.msra.mxu0 0.0
  %55 = vmatprep.subr.mxu0 0.0
  %56 = vmatpush1.msra.mxu0 0.0
  %57 = vmatprep.subr.mxu0 0.0
  %58 = vmatpush1.msra.mxu0 0.0
  %59 = vmatprep.subr.mxu0 0.0
  %60 = vmatpush1.msra.mxu0 0.0
  %61 = vmatprep.subr.mxu0 0.0
  %62 = vmatpush1.msra.mxu0 0.0
  %63 = vmatprep.subr.mxu0 0.0
  %64 = vmatpush1.msra.mxu0 0.0
  %65 = vmatprep.subr.mxu0 0.0
  %66 = vmatpush1.msra.mxu0 0.0
  %67 = vmatprep.subr.mxu0 0.0
  %68 = vmatpush1.msra.mxu0 0.0
  %69 = vmatprep.subr.mxu0 0.0
  %70 = vmatpush1.msra.mxu0 0.0
  %71 = vmatprep.subr.mxu0 0.0
  %72 = vmatpush1.msra.mxu0 0.0
  %73 = vmatprep.subr.mxu0 0.0
  %74 = vmatpush1.msra.mxu0 0.0
  %75 = vmatprep.subr.mxu0 0.0
  %76 = vmatpush1.msra.mxu0 0.0
  %77 = vmatprep.subr.mxu0 0.0
  %78 = vmatpush1.msra.mxu0 0.0
  %79 = vmatprep.subr.mxu0 0.0
  %80 = vmatpush1.msra.mxu0 0.0
  %81 = vmatprep.subr.mxu0 0.0
  %82 = vmatpush1.msra.mxu0 0.0
  %83 = vmatprep.subr.mxu0 0.0
  %84 = vmatpush1.msra.mxu0 0.0
  %85 = vmatprep.subr.mxu0 0.0
  %86 = vmatpush1.msra.mxu0 0.0
  %87 = vmatprep.subr.mxu0 0.0
  %88 = vmatpush1.msra.mxu0 0.0
  %89 = vmatprep.subr.mxu0 0.0
  %90 = vmatpush1.msra.mxu0 0.0
  %91 = vmatprep.subr.mxu0 0.0
  %92 = vmatpush1.msra.mxu0 0.0
  %93 = vmatprep.subr.mxu0 0.0
  %94 = vmatpush1.msra.mxu0 0.0
  %95 = vmatprep.subr.mxu0 0.0
  %96 = vmatpush1.msra.mxu0 0.0
  %97 = vmatprep.subr.mxu0 0.0
  %98 = vmatpush1.msra.mxu0 0.0
  %99 = vmatprep.subr.mxu0 0.0
  %100 = vmatpush1.msra.mxu0 0.0
  %101 = vmatprep.subr.mxu0 0.0
  %102 = vmatpush1.msra.mxu0 0.0
  %103 = vmatprep.mubr.f32.mxu0 0.0
  %104 = vmatmul.mubr.f32.gmra.mrb[0].mxu0 %v34
  %v105 = vpop.f32.mrb[0].mxu0
  %v106 = vadd.f32 %v30, %v105
  %v107 = vpop.f32.mrb[0].mxu0
  %108 = vmatprep.mubr.f32.mxu0 0.0
  %109 = vmatmul.mubr.f32.gmra.mrb[0].mxu0 %v37
  %v110 = vpop.f32.mrb[0].mxu0
  %v111 = vadd.f32 %v30, %v110
  %v112 = vpop.f32.mrb[0].mxu0
  %113 = vdwg.mxu0
  %v114 = vmul.f32 %v23, %v106
  %v115 = vmul.f32 %v24, %v111
  %v116 = vsel %vm32, %v114, 0.0
  %117 = vadd.xlane.f32.xlu0 %v116
  %v118 = vpop.xlane.xlu0 %117
  %v119 = vsel %vm32, %v115, 0.0
  %120 = vadd.xlane.f32.xlu0 %v119
  %v121 = vpop.xlane.xlu0 %120
  %v122 = vadd.f32 %v118, %v106
  %v123 = vadd.f32 %v121, %v111
  %126 = vset.pattern.permute.xlu0 32
  %127 = vperm.xlu0 %126, %v122
  %v128 = vpop.permute.xlu0 %127
  %129 = vset.pattern.permute.xlu0 32
  %130 = vperm.xlu0 %129, %v123
  %v131 = vpop.permute.xlu0 %130
  %v132 = vlaneseq
  %v133 = vand.u32 %v132, 127
  %v134 = vlaneseq
  %v135 = vshrl.u32 %v134, 7
  %v136 = vsub.s32 %v133, %v135
  %v137 = vrot.slane %v128, %v136
  %v138 = vadd.s32 %v133, 4294967288
  %v139 = vlaneseq
  %v140 = vshrl.u32 %v139, 7
  %v141 = vsub.s32 %v138, %v140
  %v142 = vrot.slane %v131, %v141
  %vm143 = vcmask 130112
  %v144 = vsel %vm143, %v142, %v137
  %vm146 = vcmask 122880
  %147 = vst.msk [vmem:[%s4] sm:$0x1] %vm146, %v144
  // Predicated region
  $region18: #{interaction_aggregation.1} parent=0 // pred_check
    _
  $region19: #{interaction_aggregation.1} parent=0 // pred_check_branch
    %149 = sbr.rel (0) target = $region21
  $region20: #{interaction_aggregation.1} parent=0 // pred_region
    _
  $region21: #{interaction_aggregation.1} parent=0 // pred_fallthru
    _
  // Predicated region
  $region22: #{interaction_aggregation.1} parent=0 // pred_check
    _
  $region23: #{interaction_aggregation.1} parent=0 // pred_check_branch
    %151 = sbr.rel (0) target = $region25
  $region24: #{interaction_aggregation.1} parent=0 // pred_region
    _
  $region25: #{interaction_aggregation.1} parent=0 // pred_fallthru
    _

</llo_original>
